<compile_context>
chip_gen: v7x
topology: tpu7x:2x2x1
jax: 0.10.0
libtpu: 0.0.40
codegen_flags: <defaults>
</compile_context>

<pallas_src>
import jax
import jax.numpy as jnp
from jax.experimental import pallas as pl
from jax.experimental.pallas import tpu as pltpu


# ----------------------------------------------------------------------------
# Kernel 1: encode-only path  forward(x, None) -> (h, None)
# ----------------------------------------------------------------------------
def _encode_kernel(x_ref, wt_ref, b_ref, h_ref):
    # x_ref is bf16 (cast in the wrapper to halve its HBM stream); wt is W.T.
    h_ref[...] = (
        jnp.dot(x_ref[...], wt_ref[...], preferred_element_type=jnp.float32)
        + b_ref[...]
    )                                              # hidden_activation is None


# ----------------------------------------------------------------------------
# Kernel 2: full SRAE step  forward(x, error_signal) -> (h, reconstructed_input)
# ----------------------------------------------------------------------------
def _make_srae_kernel(nsub):
    """Build the SRAE kernel body, unrolled over `nsub` independent row
    sub-tiles so the scheduler can overlap one sub-tile's matmuls with the
    other's reductions / mask math."""

    def kernel(x_ref, err_ref, wt_ref, w_ref, b_ref, rb_ref, h_ref, rec_ref):
        wt = wt_ref[...]                           # (I, O) bf16  (= W.T)
        w = w_ref[...]                             # (O, I) bf16
        b = b_ref[...]                             # (1, O) f32
        rb = rb_ref[...]                           # (1, I) f32
        sub = x_ref.shape[0] // nsub
        two_over_I = 2.0 / x_ref.shape[1]

        for s in range(nsub):                      # static unroll (one BB)
            rows = pl.ds(s * sub, sub)
            x = x_ref[rows, :]                     # (sub, I) f32
            err = err_ref[rows, :]                 # (sub, O) f32

            # h = encoder(x)   (hidden_activation is None)
            lin = jnp.dot(x.astype(jnp.bfloat16), wt,
                          preferred_element_type=jnp.float32) + b      # (sub,O)
            h = lin

            # reconstructed_input = F.linear(h, W.t(), rb) = h @ W + rb
            r = jnp.dot(h.astype(jnp.bfloat16), w,
                        preferred_element_type=jnp.float32) + rb       # (sub,I)

            # MSE backward (closed form): W.grad = (2/I)*outer(h, r - x)
            # predict = lin + coef*h, delta = h - predict = -coef*h (h == lin).
            coef = two_over_I * jnp.sum(x * (r - x), axis=-1, keepdims=True)
            delta = -coef * h                                          # (sub,O)

            # activation_scaling: max|err| / max(delta) per row (exact divide —
            # an approx reciprocal can flip the mask compare near its boundary).
            scaling = (jnp.max(jnp.abs(err), axis=-1, keepdims=True)
                       / jnp.max(delta, axis=-1, keepdims=True))
            adjusted = delta * scaling
            masked = jnp.where(jnp.abs(err - adjusted) < jnp.abs(err),
                               h, 0.0).astype(jnp.bfloat16)

            # masked reconstruction: F.linear(h * mask, W.t(), rb)
            rec = jnp.dot(masked, w, preferred_element_type=jnp.float32) + rb

            h_ref[rows, :] = h
            rec_ref[rows, :] = rec

    return kernel


# ----------------------------------------------------------------------------
# Wrapper
# ----------------------------------------------------------------------------
def _round_up(n, m):
    return ((n + m - 1) // m) * m


def _pallas_apply(kernel, inputs, batch_tiled, out_last_dims, bt, nb, *,
                  flops, transcendentals):
    """Dispatch `kernel` on 2D `inputs`.  batch_tiled[k] marks inputs tiled over
    the (padded) batch dim; the rest (W / W.T / biases) use a constant
    index_map (fetched once, single-buffered resident in VMEM).  Outputs are
    f32 (bt*nb, d) slabs for d in out_last_dims."""
    Bp = bt * nb
    out_shape = tuple(jax.ShapeDtypeStruct((Bp, d), jnp.float32)
                      for d in out_last_dims)
    in_bytes = sum(int(a.size) * a.dtype.itemsize for a in inputs)
    out_bytes = sum(Bp * d * 4 for d in out_last_dims)
    cost = pl.CostEstimate(flops=int(flops),
                           transcendentals=int(transcendentals),
                           bytes_accessed=int(in_bytes + out_bytes))

    if nb == 1:
        # One tile covers everything (incl. legacy single-sample calls): no
        # grid / pipeline machinery; every operand is one full VMEM block.
        vmem = pl.BlockSpec(memory_space=pltpu.MemorySpace.VMEM)
        return pl.pallas_call(
            kernel,
            out_shape=out_shape,
            in_specs=[vmem] * len(inputs),
            out_specs=tuple(vmem for _ in out_last_dims),
            cost_estimate=cost,
        )(*inputs)

    # VMEM budget: double-buffered batch tiles, residents counted twice so the
    # budget also covers the fallback (default double buffering).  Clamp to
    # [32 MiB, 48 MiB] — 48 MiB leaves headroom on v7x's 64 MiB physical VMEM.
    tile_bytes = sum(bt * a.shape[1] * a.dtype.itemsize
                     for a, t in zip(inputs, batch_tiled) if t)
    tile_bytes += sum(bt * d * 4 for d in out_last_dims)
    resident_bytes = sum(int(a.size) * a.dtype.itemsize
                         for a, t in zip(inputs, batch_tiled) if not t)
    vmem_limit = int(min(max(2 * tile_bytes + 2 * resident_bytes + (2 << 20),
                             32 << 20), 48 << 20))

    def build(resident_pipeline_mode):
        def in_spec(arr, tiled):
            if tiled:
                return pl.BlockSpec((bt, arr.shape[1]), lambda i: (i, 0))
            kw = ({} if resident_pipeline_mode is None
                  else {"pipeline_mode": resident_pipeline_mode})
            return pl.BlockSpec(arr.shape, lambda i: (0, 0), **kw)

        return pl.pallas_call(
            kernel,
            out_shape=out_shape,
            grid=(nb,),
            in_specs=[in_spec(a, t) for a, t in zip(inputs, batch_tiled)],
            out_specs=tuple(pl.BlockSpec((bt, d), lambda i: (i, 0))
                            for d in out_last_dims),
            compiler_params=pltpu.CompilerParams(
                dimension_semantics=("parallel",),   # shard tiles over TCs
                vmem_limit_bytes=vmem_limit),
            cost_estimate=cost,
        )

    try:
        # Resident operands single-buffered: their block index never changes,
        # so the revolving second buffer is pure VMEM waste.
        return build(pl.Buffered(buffer_count=1))(*inputs)
    except Exception:
        # JAX builds without single-buffer pipeline_mode support on the main
        # pallas_call pipeline: fall back to default double-buffering.
        return build(None)(*inputs)


def srae_forward(x, w, b, rb, error_signal=None, *, block_b=256):
    """Mirrors ReactiveAutoencoder.forward, vectorized over a leading batch dim.

    x: (I,) or (B, I); error_signal: None, (O,) or (B, O) ((O,) with B > 1 is
    broadcast to every sample).  Returns (h, None) or (h, reconstructed_input),
    matching x's leading-dim convention; each batch row is an independent
    online sample (per-row max reductions — exact module semantics at B=1).
    """
    x = jnp.asarray(x, jnp.float32)
    single = x.ndim == 1
    x2 = x[None, :] if single else x
    B, I = x2.shape
    O = w.shape[0]

    # W dominates bytes moved; bf16 is the native MXU dtype.  Both orientations
    # are built once in the wrapper so no transpose is emitted per grid step.
    w_bf = jnp.asarray(w, jnp.bfloat16)          # (O, I): rhs of h @ W
    wt_bf = w_bf.T                               # (I, O): rhs of x @ W.T
    b2 = jnp.asarray(b, jnp.float32).reshape(1, O)
    rb2 = jnp.asarray(rb, jnp.float32).reshape(1, I)

    # Batch tile: multiple of 8 sublanes, up to block_b (256 fills the MXU M
    # dim on v6e/v7x); keep >= 2 grid steps whenever B > 8 so both v7x
    # TensorCores receive a "parallel" tile.
    bt = min(block_b, _round_up(B, 8))
    if B > 8:
        bt = min(bt, _round_up((B + 1) // 2, 8))
    Bp = _round_up(B, bt)
    nb = Bp // bt

    if error_signal is None:
        x_bf = x2.astype(jnp.bfloat16)           # halve the batch-scaled stream
        if Bp != B:
            x_bf = jnp.pad(x_bf, ((0, Bp - B), (0, 0)))
        (h,) = _pallas_apply(_encode_kernel, [x_bf, wt_bf, b2],
                             [True, False, False], [O], bt, nb,
                             flops=2 * Bp * I * O, transcendentals=0)
        h = h[:B]
        return (h[0], None) if single else (h, None)

    err = jnp.asarray(error_signal, jnp.float32)
    err2 = err[None, :] if err.ndim == 1 else err
    if err2.shape[0] == 1 and B > 1:
        # One error signal shared by every sample in the batch.
        err2 = jnp.broadcast_to(err2, (B, O))
    if Bp != B:
        x2 = jnp.pad(x2, ((0, Bp - B), (0, 0)))
        err2 = jnp.pad(err2, ((0, Bp - err2.shape[0]), (0, 0)))

    # Two independent row sub-tiles per grid step (when the tile is big enough)
    # let MXU passes of one overlap the reductions / mask math of the other.
    nsub = 2 if (bt % 16 == 0 and bt >= 64) else 1
    h, rec = _pallas_apply(
        _make_srae_kernel(nsub),
        [x2, err2, wt_bf, w_bf, b2, rb2],
        [True, True, False, False, False, False], [O, I], bt, nb,
        flops=6 * Bp * I * O, transcendentals=Bp)
    h, rec = h[:B], rec[:B]
    return (h[0], rec[0]) if single else (h, rec)


# ----------------------------------------------------------------------------
# Pure-JAX reference (same bf16-matmul precision as the kernel) for validation.
# ----------------------------------------------------------------------------
def _srae_reference(x, W, b, rb, err):
    W_bf = W.astype(jnp.bfloat16)
    lin = jnp.dot(x.astype(jnp.bfloat16), W_bf.T,
                  preferred_element_type=jnp.float32) + b
    h = lin
    r = jnp.dot(h.astype(jnp.bfloat16), W_bf,
                preferred_element_type=jnp.float32) + rb
    coef = (2.0 / x.shape[-1]) * jnp.sum(x * (r - x), axis=-1, keepdims=True)
    delta = -coef * h
    scaling = (jnp.max(jnp.abs(err), axis=-1, keepdims=True)
               / jnp.max(delta, axis=-1, keepdims=True))
    adjusted = delta * scaling
    masked = jnp.where(jnp.abs(err - adjusted) < jnp.abs(err), h, 0.0)
    rec = jnp.dot(masked.astype(jnp.bfloat16), W_bf,
                  preferred_element_type=jnp.float32) + rb
    return h, rec


if __name__ == "__main__":
    # Lane-aligned feature dims (multiples of 128) -> dense stores.
    input_size, output_size, batch = 256, 128, 256

    key = jax.random.PRNGKey(0)
    kw, kb, kx, ke = jax.random.split(key, 4)

    bound = 1.0 / (input_size ** 0.5)            # nn.Linear-style init
    W = jax.random.uniform(kw, (output_size, input_size), jnp.float32, -bound, bound)
    b = jax.random.uniform(kb, (output_size,), jnp.float32, -bound, bound)
    rb = jnp.zeros((input_size,), jnp.float32)   # reconstruction_bias='zeros'

    x = jax.random.normal(kx, (batch, input_size), jnp.float32)
    error_signal = jax.random.normal(ke, (batch, output_size), jnp.float32)

    # Encode-only pass (forward(x) with no error signal) -> (h, None).
    h_only, rec_none = srae_forward(x, W, b, rb)

    # Fused SRAE pass: one launch returns both h and the masked reconstruction.
    h, rec = srae_forward(x, W, b, rb, error_signal=error_signal)

    # Legacy single-sample (online) usage exercises the no-grid branch.
    h1, rec1 = srae_forward(x[0], W, b, rb, error_signal=error_signal[0])

    # Batched x with a single shared error signal (broadcast edge case).
    h4, rec4 = srae_forward(x[:4], W, b, rb, error_signal=error_signal[0])

    jax.block_until_ready((h_only, h, rec, h1, rec1, h4, rec4))

    # Shape / structural checks.
    assert rec_none is None
    assert h_only.shape == (batch, output_size) and h.shape == (batch, output_size)
    assert rec.shape == (batch, input_size)
    assert h1.shape == (output_size,) and rec1.shape == (input_size,)
    assert h4.shape == (4, output_size) and rec4.shape == (4, input_size)

    # Encoder vs f32 reference (bf16 matmul tolerance).
    h_f32_ref = x @ W.T + b
    tol_h = 5e-2 * float(jnp.max(jnp.abs(h_f32_ref))) + 1e-2
    assert float(jnp.max(jnp.abs(h - h_f32_ref))) < tol_h
    assert float(jnp.max(jnp.abs(h_only - h_f32_ref))) < tol_h

    # Full-path reference at matching precision.  The mask compare can flip on
    # near-exact ties (changing whole rows of rec), so require a high agreement
    # fraction rather than strict elementwise equality.
    h_ref, rec_ref = _srae_reference(x, W, b, rb, error_signal)
    tol_r = 1e-2 * float(jnp.max(jnp.abs(rec_ref))) + 1e-3
    frac_ok = float(jnp.mean((jnp.abs(rec - rec_ref) <= tol_r).astype(jnp.float32)))
    assert frac_ok > 0.98, frac_ok

    # Single-sample path agrees with row 0 of the batched path.
    assert float(jnp.max(jnp.abs(h1 - h[0]))) < 1e-3
    assert float(jnp.max(jnp.abs(rec1 - rec[0]))) < tol_r

    assert bool(jnp.isfinite(h).all()) and bool(jnp.isfinite(rec).all())
    assert bool(jnp.isfinite(rec1).all()) and bool(jnp.isfinite(rec4).all())

    print("KERNEL_OK")
</pallas_src>

<mosaic_0001>
module attributes {stable_mosaic.version = 11 : i64} {
  func.func @_encode_kernel(%arg0: i32, %arg1: memref<128x256xbf16, #tpu.memory_space<vmem>>, %arg2: memref<256x128xbf16, #tpu.memory_space<vmem>>, %arg3: memref<1x128xf32, #tpu.memory_space<vmem>>, %arg4: memref<128x128xf32, #tpu.memory_space<vmem>>) attributes {dimension_semantics = [#tpu.dimension_semantics<parallel>], iteration_bounds = array<i64: 2>, scalar_prefetch = 0 : i64, scratch_operands = 0 : i64, tpu.core_type = #tpu.core_type<tc>, window_params = [{transform_indices = @transform_0, window_bounds = array<i64: 128, 256>}, {pipeline_mode = #tpu.pipeline_mode<synchronous>, transform_indices = @transform_1, window_bounds = array<i64: 256, 128>}, {pipeline_mode = #tpu.pipeline_mode<synchronous>, transform_indices = @transform_2, window_bounds = array<i64: 1, 128>}, {transform_indices = @transform_3, window_bounds = array<i64: 128, 128>}]} {
    %c0 = arith.constant 0 : index
    %c0_0 = arith.constant 0 : index
    %0 = vector.load %arg1[%c0, %c0_0] : memref<128x256xbf16, #tpu.memory_space<vmem>>, vector<128x256xbf16>
    %c0_1 = arith.constant 0 : index
    %c0_2 = arith.constant 0 : index
    %1 = vector.load %arg2[%c0_1, %c0_2] : memref<256x128xbf16, #tpu.memory_space<vmem>>, vector<256x128xbf16>
    %cst = arith.constant dense<0.000000e+00> : vector<128x128xf32>
    %2 = tpu.matmul %0, %1, %cst {dimension_numbers = #tpu.dot_dimension_numbers<[1], [0], [0], [1], [0, 0, 1, 1], [], []>} : vector<128x256xbf16>, vector<256x128xbf16>, vector<128x128xf32> -> vector<128x128xf32>
    %c0_3 = arith.constant 0 : index
    %c0_4 = arith.constant 0 : index
    %3 = vector.load %arg3[%c0_3, %c0_4] : memref<1x128xf32, #tpu.memory_space<vmem>>, vector<1x128xf32>
    %4 = vector.broadcast %3 : vector<1x128xf32> to vector<128x128xf32>
    %5 = arith.addf %2, %4 : vector<128x128xf32>
    %c0_5 = arith.constant 0 : index
    %c0_6 = arith.constant 0 : index
    %6 = vector.load %arg4[%c0_5, %c0_6] : memref<128x128xf32, #tpu.memory_space<vmem>>, vector<128x128xf32>
    tpu.vector_store %arg4[%c0_5, %c0_6], %5 {strides = array<i32>} : memref<128x128xf32, #tpu.memory_space<vmem>>, vector<128x128xf32>,
    return
  }
  func.func @transform_0(%arg0: i32) -> (i32, i32) {
    %c0_i32 = arith.constant 0 : i32
    %c0_i32_0 = arith.constant 0 : i32
    return %arg0, %c0_i32 : i32, i32
  }
  func.func @transform_1(%arg0: i32) -> (i32, i32) {
    %c0_i32 = arith.constant 0 : i32
    %c0_i32_0 = arith.constant 0 : i32
    %c0_i32_1 = arith.constant 0 : i32
    return %c0_i32, %c0_i32_0 : i32, i32
  }
  func.func @transform_2(%arg0: i32) -> (i32, i32) {
    %c0_i32 = arith.constant 0 : i32
    %c0_i32_0 = arith.constant 0 : i32
    %c0_i32_1 = arith.constant 0 : i32
    return %c0_i32, %c0_i32_0 : i32, i32
  }
  func.func @transform_3(%arg0: i32) -> (i32, i32) {
    %c0_i32 = arith.constant 0 : i32
    %c0_i32_0 = arith.constant 0 : i32
    return %arg0, %c0_i32 : i32, i32
  }
}

module attributes {stable_mosaic.version = 11 : i64} {
  func.func @_encode_kernel(%arg0: i32, %arg1: memref<128x256xbf16, #tpu.memory_space<vmem>>, %arg2: memref<256x128xbf16, #tpu.memory_space<vmem>>, %arg3: memref<1x128xf32, #tpu.memory_space<vmem>>, %arg4: memref<128x128xf32, #tpu.memory_space<vmem>>) attributes {dimension_semantics = [#tpu.dimension_semantics<parallel>], iteration_bounds = array<i64: 2>, scalar_prefetch = 0 : i64, scratch_operands = 0 : i64, tpu.core_type = #tpu.core_type<tc>, window_params = [{transform_indices = @transform_0, window_bounds = array<i64: 128, 256>}, {pipeline_mode = #tpu.pipeline_mode<synchronous>, transform_indices = @transform_1, window_bounds = array<i64: 256, 128>}, {pipeline_mode = #tpu.pipeline_mode<synchronous>, transform_indices = @transform_2, window_bounds = array<i64: 1, 128>}, {transform_indices = @transform_3, window_bounds = array<i64: 128, 128>}]} {
    %c0 = arith.constant 0 : index
    %c0_0 = arith.constant 0 : index
    %0 = vector.load %arg1[%c0, %c0_0] : memref<128x256xbf16, #tpu.memory_space<vmem>>, vector<128x256xbf16>
    %c0_1 = arith.constant 0 : index
    %c0_2 = arith.constant 0 : index
    %1 = vector.load %arg2[%c0_1, %c0_2] : memref<256x128xbf16, #tpu.memory_space<vmem>>, vector<256x128xbf16>
    %cst = arith.constant dense<0.000000e+00> : vector<128x128xf32>
    %2 = tpu.matmul %0, %1, %cst {dimension_numbers = #tpu.dot_dimension_numbers<[1], [0], [0], [1], [0, 0, 1, 1], [], []>} : vector<128x256xbf16>, vector<256x128xbf16>, vector<128x128xf32> -> vector<128x128xf32>
    %c0_3 = arith.constant 0 : index
    %c0_4 = arith.constant 0 : index
    %3 = vector.load %arg3[%c0_3, %c0_4] : memref<1x128xf32, #tpu.memory_space<vmem>>, vector<1x128xf32>
    %4 = vector.broadcast %3 : vector<1x128xf32> to vector<128x128xf32>
    %5 = arith.addf %2, %4 : vector<128x128xf32>
    %c0_5 = arith.constant 0 : index
    %c0_6 = arith.constant 0 : index
    %6 = vector.load %arg4[%c0_5, %c0_6] : memref<128x128xf32, #tpu.memory_space<vmem>>, vector<128x128xf32>
    tpu.vector_store %arg4[%c0_5, %c0_6], %5 {strides = array<i32>} : memref<128x128xf32, #tpu.memory_space<vmem>>, vector<128x128xf32>,
    return
  }
  func.func @transform_0(%arg0: i32) -> (i32, i32) {
    %c0_i32 = arith.constant 0 : i32
    %c0_i32_0 = arith.constant 0 : i32
    return %arg0, %c0_i32 : i32, i32
  }
  func.func @transform_1(%arg0: i32) -> (i32, i32) {
    %c0_i32 = arith.constant 0 : i32
    %c0_i32_0 = arith.constant 0 : i32
    %c0_i32_1 = arith.constant 0 : i32
    return %c0_i32, %c0_i32_0 : i32, i32
  }
  func.func @transform_2(%arg0: i32) -> (i32, i32) {
    %c0_i32 = arith.constant 0 : i32
    %c0_i32_0 = arith.constant 0 : i32
    %c0_i32_1 = arith.constant 0 : i32
    return %c0_i32, %c0_i32_0 : i32, i32
  }
  func.func @transform_3(%arg0: i32) -> (i32, i32) {
    %c0_i32 = arith.constant 0 : i32
    %c0_i32_0 = arith.constant 0 : i32
    return %arg0, %c0_i32 : i32, i32
  }
}

</mosaic_0001>

<llo_original>
// kernel: tpu_custom_call.1
$region0: #{tpu_custom_call.1}
  #allocation0 [shape = 'u32[]', space=smem, size = 0x4, offset = 0x4, fixed_abs, tag = 'smem constant byte address 0x4 - core index']
  #allocation1 [shape = 'u32[144,128]{1,0:T(1,128)}', space=vmem, size = 0x12000, scoped, tag = 'internal scratch']
  %s0 = inlined_call_operand.hbm [shape: bf16[256,256], index: 0, kind: input, shape index: {}]
  %s1 = inlined_call_operand.hbm [shape: bf16[256,128], index: 1, kind: input, shape index: {}]
  %s2 = inlined_call_operand.vmem [shape: f32[1,128], index: 2, kind: input, shape index: {}]
  %s3 = inlined_call_operand.hbm [shape: f32[256,128], index: 3, kind: output, shape index: {}]
  %s4 = sld [smem:[#allocation0]]
  $region53: #{tpu_custom_call.1} parent=0
    _
  %s6 = ssub.s32 1, %s4
  %s7 = scalar_select 0, %s6, %s4
  $region1: #{tpu_custom_call.1} parent=0
    #allocation2 [shape = 'u8[131072]{0}', space=vmem, size = 0x20000, scoped, tag = 'input window, operand 0']
    #allocation3 [shape = 's32[2]{0}', space=sflag, size = 0x8, scoped, tag = 'scoped memory for tpu_custom_call.1']
    #allocation4 [shape = 's32[2]{0}', space=sflag, size = 0x8, scoped, tag = 'scoped memory for tpu_custom_call.1']
    #allocation5 [shape = 'u8[65536]{0}', space=vmem, size = 0x10000, scoped, tag = 'input window, operand 1, single buffered']
    #allocation6 [shape = 's32[1]{0}', space=sflag, size = 0x4, scoped, tag = 'scoped memory for tpu_custom_call.1']
    #allocation7 [shape = 'u8[131072]{0}', space=vmem, size = 0x20000, scoped, tag = 'output window, operand 0']
    %8 = vsyncpa [#allocation3], 0
    %s9 = scalar_lea.sflag [#allocation3], 1
    %10 = vsyncpa %s9, 0
    %11 = vsyncpa [#allocation6], 0
    %12 = vsyncpa [#allocation4], 0
    %s13 = scalar_lea.sflag [#allocation4], 1
    %14 = vsyncpa %s13, 0
    loop: start=0, step=1, limit=4
    $region2: #{tpu_custom_call.1} parent=1 // loop_pre_header
      _
    $region3: #{tpu_custom_call.1} parent=1 // loop_header
      %s16 = sphi 0, %s20
      %p17 = scmp.ge.s32.totalorder %s16, 4
      %s26 = sphi 0, %s28
      %s29 = sphi 0, %s26
      %s30 = sphi 0, %s29
      %s46 = sphi 0, %s30
      %s50 = sphi 0, %s50
      %s52 = sphi 0, %s50
      %s53 = sphi 0, %s52
      %s67 = sphi 0, %s53
      %s71 = sphi 0, %s71
      %s73 = sphi 0, %s71
      %s74 = sphi 0, %s73
      %s88 = sphi 0, %s74
      %s94 = sphi 0, %s96
      %s97 = sphi 0, %s94
      %s98 = sphi 0, %s97
      %s114 = sphi 0, %s98
    $region4: #{tpu_custom_call.1} parent=1 // loop_header_branch
      %19 = sbr.rel (%p17) target = $region8
    $region5: #{tpu_custom_call.1} parent=1 // loop_body
      %s21 = ssub.s32 %s16, 1
      %s22 = ssub.s32 %s16, 2
      %s23 = sadd.s32 %s16, 1
      %s24 = ssub.s32 %s16, %s23
      %p25 = scmp.eq.s32.totalorder %s24, 0
      %s27 = sadd.s32 %s26, 1
      %s28 = scalar_select %p25, %s26, %s27
      %p31 = pneg %p25
      %p32 = scmp.eq.s32.totalorder %s16, 1
      %p33 = por %p31, %p32
      %p34 = scmp.ne.s32.totalorder %s26, %s29
      %p35 = scmp.eq.s32.totalorder %s16, 0
      %p36 = por %p34, %p35
      %p37 = scmp.ne.s32.totalorder %s26, %s29
      %p38 = scmp.eq.s32.totalorder %s21, 1
      %p39 = por %p37, %p38
      %p40 = scmp.ne.s32.totalorder %s29, %s30
      %p41 = scmp.eq.s32.totalorder %s21, 0
      %p42 = por %p40, %p41
      %p43 = scmp.ne.s32.totalorder %s29, %s30
      %p44 = scmp.eq.s32.totalorder %s22, 1
      %p45 = por %p43, %p44
      %p47 = scmp.ne.s32.totalorder %s30, %s46
      %p48 = scmp.eq.s32.totalorder %s22, 0
      %p49 = por %p47, %p48
      %s51 = sadd.s32 %s50, 1
      %p54 = scmp.eq.s32.totalorder %s16, 1
      %p55 = scmp.ne.s32.totalorder %s50, %s52
      %p56 = scmp.eq.s32.totalorder %s16, 0
      %p57 = por %p55, %p56
      %p58 = scmp.ne.s32.totalorder %s50, %s52
      %p59 = scmp.eq.s32.totalorder %s21, 1
      %p60 = por %p58, %p59
      %p61 = scmp.ne.s32.totalorder %s52, %s53
      %p62 = scmp.eq.s32.totalorder %s21, 0
      %p63 = por %p61, %p62
      %p64 = scmp.ne.s32.totalorder %s52, %s53
      %p65 = scmp.eq.s32.totalorder %s22, 1
      %p66 = por %p64, %p65
      %p68 = scmp.ne.s32.totalorder %s53, %s67
      %p69 = scmp.eq.s32.totalorder %s22, 0
      %p70 = por %p68, %p69
      %s72 = sadd.s32 %s71, 1
      %p75 = scmp.eq.s32.totalorder %s16, 1
      %p76 = scmp.ne.s32.totalorder %s71, %s73
      %p77 = scmp.eq.s32.totalorder %s16, 0
      %p78 = por %p76, %p77
      %p79 = scmp.ne.s32.totalorder %s71, %s73
      %p80 = scmp.eq.s32.totalorder %s21, 1
      %p81 = por %p79, %p80
      %p82 = scmp.ne.s32.totalorder %s73, %s74
      %p83 = scmp.eq.s32.totalorder %s21, 0
      %p84 = por %p82, %p83
      %p85 = scmp.ne.s32.totalorder %s73, %s74
      %p86 = scmp.eq.s32.totalorder %s22, 1
      %p87 = por %p85, %p86
      %p89 = scmp.ne.s32.totalorder %s74, %s88
      %p90 = scmp.eq.s32.totalorder %s22, 0
      %p91 = por %p89, %p90
      %s92 = ssub.s32 %s16, %s23
      %p93 = scmp.eq.s32.totalorder %s92, 0
      %s95 = sadd.s32 %s94, 1
      %s96 = scalar_select %p93, %s94, %s95
      %p99 = pneg %p93
      %p100 = scmp.eq.s32.totalorder %s16, 1
      %p101 = por %p99, %p100
      %p102 = scmp.ne.s32.totalorder %s94, %s97
      %p103 = scmp.eq.s32.totalorder %s16, 0
      %p104 = por %p102, %p103
      %p105 = scmp.ne.s32.totalorder %s94, %s97
      %p106 = scmp.eq.s32.totalorder %s21, 1
      %p107 = por %p105, %p106
      %p108 = scmp.ne.s32.totalorder %s97, %s98
      %p109 = scmp.eq.s32.totalorder %s21, 0
      %p110 = por %p108, %p109
      %p111 = scmp.ne.s32.totalorder %s97, %s98
      %p112 = scmp.eq.s32.totalorder %s22, 1
      %p113 = por %p111, %p112
      %p115 = scmp.ne.s32.totalorder %s98, %s114
      %p116 = scmp.eq.s32.totalorder %s22, 0
      %p117 = por %p115, %p116
      %p118 = scmp.le.s32.totalorder 1, %s16
      %p119 = scmp.lt.s32.totalorder %s16, 3
      %p120 = pnand %p118, %p119
      %p121 = pneg %p120
      // Predicated region
      $region9: #{tpu_custom_call.1} parent=5 // pred_check
        _
      $region10: #{tpu_custom_call.1} parent=5 // pred_check_branch
        %123 = sbr.rel (%p120) target = $region12
      $region11: #{tpu_custom_call.1} parent=5 // pred_region
        %s124 = ssub.s32 %s16, 1
        // Predicated region
        $region13: #{tpu_custom_call.1} parent=11 // pred_check
          %p125 = pneg %p63
        $region14: #{tpu_custom_call.1} parent=11 // pred_check_branch
          %127 = sbr.rel (%p125) target = $region16
        $region15: #{tpu_custom_call.1} parent=11 // pred_region
          %s129 = ssub.s32 2048, 2048
          %130 = vsyncadd [#allocation6], %s129
          %s131 = sshll.u32 [#allocation5], 4
          %s132 = int_to_ptr.vmem [resolvable:$true] %s131
          %137 = dma.hbm_to_vmem [thread:$0]  %s1, 2048, %s132, [#allocation6], 64, 64, 4
        $region16: #{tpu_custom_call.1} parent=11 // pred_fallthru
          _
        // Predicated region
        $region17: #{tpu_custom_call.1} parent=11 // pred_check
          %p138 = pneg %p84
        $region18: #{tpu_custom_call.1} parent=11 // pred_check_branch
          %140 = sbr.rel (%p138) target = $region20
        $region19: #{tpu_custom_call.1} parent=11 // pred_region
          _
        $region20: #{tpu_custom_call.1} parent=11 // pred_fallthru
          _
      $region12: #{tpu_custom_call.1} parent=5 // pred_fallthru
        _
      %p141 = scmp.lt.s32.totalorder %s16, 2
      // Predicated region
      $region21: #{tpu_custom_call.1} parent=5 // pred_check
        %p142 = pneg %p141
      $region22: #{tpu_custom_call.1} parent=5 // pred_check_branch
        %144 = sbr.rel (%p142) target = $region24
      $region23: #{tpu_custom_call.1} parent=5 // pred_region
        // Predicated region
        $region25: #{tpu_custom_call.1} parent=23 // pred_check
          %p145 = pneg %p36
        $region26: #{tpu_custom_call.1} parent=23 // pred_check_branch
          %147 = sbr.rel (%p145) target = $region28
        $region27: #{tpu_custom_call.1} parent=23 // pred_region
          %s148 = sand.u32 %s26, 1
          %s149 = scalar_lea.sflag [#allocation3], %s148
          %s150 = sand.u32 %s26, 1
          %s151 = smul.addr %s150, 128
          %s152 = scalar_lea.vmem [#allocation2], %s151
          %s153 = smul.u32 16, %s16
          %s155 = ssub.s32 2048, 2048
          %156 = vsyncadd %s149, %s155
          %s157 = smul.addr %s153, 2
          %s158 = smul.addr %s157, 64
          %s159 = scalar_lea.hbm %s0, %s158
          %s160 = sshll.u32 %s152, 4
          %s161 = int_to_ptr.vmem [resolvable:$true] %s160
          %166 = dma.hbm_to_vmem [thread:$0]  %s159, 2048, %s161, %s149, 128, 128, 8
        $region28: #{tpu_custom_call.1} parent=23 // pred_fallthru
          _
      $region24: #{tpu_custom_call.1} parent=5 // pred_fallthru
        _
      %p167 = scmp.le.s32.totalorder 1, %s16
      %p168 = scmp.lt.s32.totalorder %s16, 3
      %p169 = pnand %p167, %p168
      %p170 = pneg %p169
      // Predicated region
      $region29: #{tpu_custom_call.1} parent=5 // pred_check
        _
      $region30: #{tpu_custom_call.1} parent=5 // pred_check_branch
        %172 = sbr.rel (%p169) target = $region32
      $region31: #{tpu_custom_call.1} parent=5 // pred_region
        %s173 = ssub.s32 %s16, 1
        %s174 = sand.u32 %s29, 1
        %s175 = scalar_lea.sflag [#allocation3], %s174
        %s176 = sand.u32 %s29, 1
        %s177 = smul.addr %s176, 128
        %s178 = scalar_lea.vmem [#allocation2], %s177
        // Predicated region
        $region33: #{tpu_custom_call.1} parent=31 // pred_check
          %p179 = pneg %p42
        $region34: #{tpu_custom_call.1} parent=31 // pred_check_branch
          %181 = sbr.rel (%p179) target = $region36
        $region35: #{tpu_custom_call.1} parent=31 // pred_region
          %182 = dma.done %s175, 2048
        $region36: #{tpu_custom_call.1} parent=31 // pred_fallthru
          _
        // Predicated region
        $region37: #{tpu_custom_call.1} parent=31 // pred_check
          %p183 = pneg %p63
        $region38: #{tpu_custom_call.1} parent=31 // pred_check_branch
          %185 = sbr.rel (%p183) target = $region40
        $region39: #{tpu_custom_call.1} parent=31 // pred_region
          %186 = dma.done [#allocation6], 2048
        $region40: #{tpu_custom_call.1} parent=31 // pred_fallthru
          _
        %s187 = sand.u32 %s29, 1
        %s188 = scalar_lea.sflag [#allocation3], %s187
        %s189 = sand.u32 %s29, 1
        %s190 = smul.addr %s189, 128
        %s191 = scalar_lea.vmem [#allocation2], %s190
        %p192 = pneg %p42
        %p193 = pneg %p39
        %p194 = pneg %p63
        %p195 = pneg %p60
        %p196 = pneg %p84
        %p197 = pneg %p81
        %p198 = pneg %p110
        %p199 = pneg %p107
        %s200 = sand.u32 %s97, 1
        %s201 = scalar_lea.sflag [#allocation4], %s200
        %s202 = sand.u32 %s97, 1
        %s203 = smul.addr %s202, 128
        %s204 = scalar_lea.vmem [#allocation7], %s203
        %s205 = smul.u32 16, %s21
        %s206 = smul.u32 16, %s21
        %v208 = vld [vmem:[%s178] sm:$0xff]
        %v209 = vld [vmem:[%s178 + $0x8] sm:$0xff]
        %v210 = vld [vmem:[%s178 + $0x10] sm:$0xff]
        %v211 = vld [vmem:[%s178 + $0x18] sm:$0xff]
        %v212 = vld [vmem:[%s178 + $0x20] sm:$0xff]
        %v213 = vld [vmem:[%s178 + $0x28] sm:$0xff]
        %v214 = vld [vmem:[%s178 + $0x30] sm:$0xff]
        %v215 = vld [vmem:[%s178 + $0x38] sm:$0xff]
        %v216 = vld [vmem:[%s178 + $0x40] sm:$0xff]
        %v217 = vld [vmem:[%s178 + $0x48] sm:$0xff]
        %v218 = vld [vmem:[%s178 + $0x50] sm:$0xff]
        %v219 = vld [vmem:[%s178 + $0x58] sm:$0xff]
        %v220 = vld [vmem:[%s178 + $0x60] sm:$0xff]
        %v221 = vld [vmem:[%s178 + $0x68] sm:$0xff]
        %v222 = vld [vmem:[%s178 + $0x70] sm:$0xff]
        %v223 = vld [vmem:[%s178 + $0x78] sm:$0xff]
        %v224 = vld [vmem:[#allocation5] sm:$0xf]
        %v225 = vld [vmem:[#allocation5 + $0x4] sm:$0xf]
        %v226 = vld [vmem:[#allocation5 + $0x8] sm:$0xf]
        %v227 = vld [vmem:[#allocation5 + $0xc] sm:$0xf]
        %v228 = vld [vmem:[#allocation5 + $0x10] sm:$0xf]
        %v229 = vld [vmem:[#allocation5 + $0x14] sm:$0xf]
        %v230 = vld [vmem:[#allocation5 + $0x18] sm:$0xf]
        %v231 = vld [vmem:[#allocation5 + $0x1c] sm:$0xf]
        %v232 = vld [vmem:[#allocation5 + $0x20] sm:$0xf]
        %v233 = vld [vmem:[#allocation5 + $0x24] sm:$0xf]
        %v234 = vld [vmem:[#allocation5 + $0x28] sm:$0xf]
        %v235 = vld [vmem:[#allocation5 + $0x2c] sm:$0xf]
        %v236 = vld [vmem:[#allocation5 + $0x30] sm:$0xf]
        %v237 = vld [vmem:[#allocation5 + $0x34] sm:$0xf]
        %v238 = vld [vmem:[#allocation5 + $0x38] sm:$0xf]
        %v239 = vld [vmem:[#allocation5 + $0x3c] sm:$0xf]
        %v240 = vld [vmem:[#allocation5 + $0x40] sm:$0xf]
        %v241 = vld [vmem:[#allocation5 + $0x44] sm:$0xf]
        %v242 = vld [vmem:[#allocation5 + $0x48] sm:$0xf]
        %v243 = vld [vmem:[#allocation5 + $0x4c] sm:$0xf]
        %v244 = vld [vmem:[#allocation5 + $0x50] sm:$0xf]
        %v245 = vld [vmem:[#allocation5 + $0x54] sm:$0xf]
        %v246 = vld [vmem:[#allocation5 + $0x58] sm:$0xf]
        %v247 = vld [vmem:[#allocation5 + $0x5c] sm:$0xf]
        %v248 = vld [vmem:[#allocation5 + $0x60] sm:$0xf]
        %v249 = vld [vmem:[#allocation5 + $0x64] sm:$0xf]
        %v250 = vld [vmem:[#allocation5 + $0x68] sm:$0xf]
        %v251 = vld [vmem:[#allocation5 + $0x6c] sm:$0xf]
        %v252 = vld [vmem:[#allocation5 + $0x70] sm:$0xf]
        %v253 = vld [vmem:[#allocation5 + $0x74] sm:$0xf]
        %v254 = vld [vmem:[#allocation5 + $0x78] sm:$0xf]
        %v255 = vld [vmem:[#allocation5 + $0x7c] sm:$0xf]
        %v256 = vld [vmem:[%s2] sm:$0x1]
        %v258 = vlaneseq
        %v259 = vshrl.u32 %v258, 7
        %v260 = vsub.s32 0, %v259
        %v261 = vrot.slane %v256, %v260
        %v279 = vunpack.c.l.b16 %v208
        %v280 = vunpack.c.h.b16 %v208
        %v281 = vunpack.c.l.b16 %v209
        %v282 = vunpack.c.h.b16 %v209
        %v283 = vunpack.c.l.b16 %v210
        %v284 = vunpack.c.h.b16 %v210
        %v285 = vunpack.c.l.b16 %v211
        %v286 = vunpack.c.h.b16 %v211
        %v287 = vunpack.c.l.b16 %v212
        %v288 = vunpack.c.h.b16 %v212
        %v289 = vunpack.c.l.b16 %v213
        %v290 = vunpack.c.h.b16 %v213
        %v291 = vunpack.c.l.b16 %v214
        %v292 = vunpack.c.h.b16 %v214
        %v293 = vunpack.c.l.b16 %v215
        %v294 = vunpack.c.h.b16 %v215
        %v295 = vunpack.c.l.b16 %v216
        %v296 = vunpack.c.h.b16 %v216
        %v297 = vunpack.c.l.b16 %v217
        %v298 = vunpack.c.h.b16 %v217
        %v299 = vunpack.c.l.b16 %v218
        %v300 = vunpack.c.h.b16 %v218
        %v301 = vunpack.c.l.b16 %v219
        %v302 = vunpack.c.h.b16 %v219
        %v303 = vunpack.c.l.b16 %v220
        %v304 = vunpack.c.h.b16 %v220
        %v305 = vunpack.c.l.b16 %v221
        %v306 = vunpack.c.h.b16 %v221
        %v307 = vunpack.c.l.b16 %v222
        %v308 = vunpack.c.h.b16 %v222
        %v309 = vunpack.c.l.b16 %v223
        %v310 = vunpack.c.h.b16 %v223
        %v311 = vpack.c.b16 %v281, %v279
        %v312 = vpack.c.b16 %v282, %v280
        %v313 = vpack.c.b16 %v285, %v283
        %v314 = vpack.c.b16 %v286, %v284
        %v315 = vpack.c.b16 %v289, %v287
        %v316 = vpack.c.b16 %v290, %v288
        %v317 = vpack.c.b16 %v293, %v291
        %v318 = vpack.c.b16 %v294, %v292
        %v319 = vpack.c.b16 %v297, %v295
        %v320 = vpack.c.b16 %v298, %v296
        %v321 = vpack.c.b16 %v301, %v299
        %v322 = vpack.c.b16 %v302, %v300
        %v323 = vpack.c.b16 %v305, %v303
        %v324 = vpack.c.b16 %v306, %v304
        %v325 = vpack.c.b16 %v309, %v307
        %v326 = vpack.c.b16 %v310, %v308
        %v375 = vunpack.c.l.b16 %v224
        %v376 = vunpack.c.l.b16 %v225
        %v377 = vunpack.c.l.b16 %v226
        %v378 = vunpack.c.l.b16 %v227
        %v379 = vunpack.c.l.b16 %v228
        %v380 = vunpack.c.l.b16 %v229
        %v381 = vunpack.c.l.b16 %v230
        %v382 = vunpack.c.l.b16 %v231
        %v383 = vunpack.c.l.b16 %v232
        %v384 = vunpack.c.l.b16 %v233
        %v385 = vunpack.c.l.b16 %v234
        %v386 = vunpack.c.l.b16 %v235
        %v387 = vunpack.c.l.b16 %v236
        %v388 = vunpack.c.l.b16 %v237
        %v389 = vunpack.c.l.b16 %v238
        %v390 = vunpack.c.l.b16 %v239
        %v391 = vunpack.c.l.b16 %v240
        %v392 = vunpack.c.l.b16 %v241
        %v393 = vunpack.c.l.b16 %v242
        %v394 = vunpack.c.l.b16 %v243
        %v395 = vunpack.c.l.b16 %v244
        %v396 = vunpack.c.l.b16 %v245
        %v397 = vunpack.c.l.b16 %v246
        %v398 = vunpack.c.l.b16 %v247
        %v399 = vunpack.c.l.b16 %v248
        %v400 = vunpack.c.l.b16 %v249
        %v401 = vunpack.c.l.b16 %v250
        %v402 = vunpack.c.l.b16 %v251
        %v403 = vunpack.c.l.b16 %v252
        %v404 = vunpack.c.l.b16 %v253
        %v405 = vunpack.c.l.b16 %v254
        %v406 = vunpack.c.l.b16 %v255
        %v407 = vpack.c.b16 %v376, %v375
        %v408 = vpack.c.b16 %v378, %v377
        %v409 = vpack.c.b16 %v380, %v379
        %v410 = vpack.c.b16 %v382, %v381
        %v411 = vpack.c.b16 %v384, %v383
        %v412 = vpack.c.b16 %v386, %v385
        %v413 = vpack.c.b16 %v388, %v387
        %v414 = vpack.c.b16 %v390, %v389
        %v415 = vpack.c.b16 %v392, %v391
        %v416 = vpack.c.b16 %v394, %v393
        %v417 = vpack.c.b16 %v396, %v395
        %v418 = vpack.c.b16 %v398, %v397
        %v419 = vpack.c.b16 %v400, %v399
        %v420 = vpack.c.b16 %v402, %v401
        %v421 = vpack.c.b16 %v404, %v403
        %v422 = vpack.c.b16 %v406, %v405
        %439 = vmatprep.subr.bf16.mxu0 0
        %440 = vmatpush1.bf16.msra.mxu0 %v407
        %441 = vmatprep.subr.bf16.mxu0 0
        %442 = vmatpush1.bf16.msra.mxu0 %v408
        %443 = vmatprep.subr.bf16.mxu0 0
        %444 = vmatpush1.bf16.msra.mxu0 %v409
        %445 = vmatprep.subr.bf16.mxu0 0
        %446 = vmatpush1.bf16.msra.mxu0 %v410
        %447 = vmatprep.subr.bf16.mxu0 0
        %448 = vmatpush1.bf16.msra.mxu0 %v411
        %449 = vmatprep.subr.bf16.mxu0 0
        %450 = vmatpush1.bf16.msra.mxu0 %v412
        %451 = vmatprep.subr.bf16.mxu0 0
        %452 = vmatpush1.bf16.msra.mxu0 %v413
        %453 = vmatprep.subr.bf16.mxu0 0
        %454 = vmatpush1.bf16.msra.mxu0 %v414
        %455 = vmatprep.subr.bf16.mxu0 0
        %456 = vmatpush1.bf16.msra.mxu0 %v415
        %457 = vmatprep.subr.bf16.mxu0 0
        %458 = vmatpush1.bf16.msra.mxu0 %v416
        %459 = vmatprep.subr.bf16.mxu0 0
        %460 = vmatpush1.bf16.msra.mxu0 %v417
        %461 = vmatprep.subr.bf16.mxu0 0
        %462 = vmatpush1.bf16.msra.mxu0 %v418
        %463 = vmatprep.subr.bf16.mxu0 0
        %464 = vmatpush1.bf16.msra.mxu0 %v419
        %465 = vmatprep.subr.bf16.mxu0 0
        %466 = vmatpush1.bf16.msra.mxu0 %v420
        %467 = vmatprep.subr.bf16.mxu0 0
        %468 = vmatpush1.bf16.msra.mxu0 %v421
        %469 = vmatprep.subr.bf16.mxu0 0
        %470 = vmatpush1.bf16.msra.mxu0 %v422
        %471 = vmatprep.mubr.bf16.mxu0 %v312
        %472 = vmatmul.mubr.bf16.gmra.mrb[0].mxu0 %v311
        %v473 = vpop.f32.mrb[0].mxu0
        %v474 = vadd.f32 %v261, %v473
        %v475 = vpop.f32.mrb[0].mxu0
        %v476 = vpop.f32.mrb[0].mxu0
        %v477 = vadd.f32 %v261, %v476
        %v478 = vpop.f32.mrb[0].mxu0
        %479 = vmatprep.mubr.bf16.mxu0 %v314
        %480 = vmatmul.mubr.bf16.gmra.mrb[0].mxu0 %v313
        %v481 = vpop.f32.mrb[0].mxu0
        %v482 = vadd.f32 %v261, %v481
        %v483 = vpop.f32.mrb[0].mxu0
        %v484 = vpop.f32.mrb[0].mxu0
        %v485 = vadd.f32 %v261, %v484
        %v486 = vpop.f32.mrb[0].mxu0
        %487 = vmatprep.mubr.bf16.mxu0 %v316
        %488 = vmatmul.mubr.bf16.gmra.mrb[0].mxu0 %v315
        %v489 = vpop.f32.mrb[0].mxu0
        %v490 = vadd.f32 %v261, %v489
        %v491 = vpop.f32.mrb[0].mxu0
        %v492 = vpop.f32.mrb[0].mxu0
        %v493 = vadd.f32 %v261, %v492
        %v494 = vpop.f32.mrb[0].mxu0
        %495 = vmatprep.mubr.bf16.mxu0 %v318
        %496 = vmatmul.mubr.bf16.gmra.mrb[0].mxu0 %v317
        %v497 = vpop.f32.mrb[0].mxu0
        %v498 = vadd.f32 %v261, %v497
        %v499 = vpop.f32.mrb[0].mxu0
        %v500 = vpop.f32.mrb[0].mxu0
        %v501 = vadd.f32 %v261, %v500
        %v502 = vpop.f32.mrb[0].mxu0
        %503 = vmatprep.mubr.bf16.mxu0 %v320
        %504 = vmatmul.mubr.bf16.gmra.mrb[0].mxu0 %v319
        %v505 = vpop.f32.mrb[0].mxu0
        %v506 = vadd.f32 %v261, %v505
        %v507 = vpop.f32.mrb[0].mxu0
        %v508 = vpop.f32.mrb[0].mxu0
        %v509 = vadd.f32 %v261, %v508
        %v510 = vpop.f32.mrb[0].mxu0
        %511 = vmatprep.mubr.bf16.mxu0 %v322
        %512 = vmatmul.mubr.bf16.gmra.mrb[0].mxu0 %v321
        %v513 = vpop.f32.mrb[0].mxu0
        %v514 = vadd.f32 %v261, %v513
        %v515 = vpop.f32.mrb[0].mxu0
        %v516 = vpop.f32.mrb[0].mxu0
        %v517 = vadd.f32 %v261, %v516
        %v518 = vpop.f32.mrb[0].mxu0
        %519 = vmatprep.mubr.bf16.mxu0 %v324
        %520 = vmatmul.mubr.bf16.gmra.mrb[0].mxu0 %v323
        %v521 = vpop.f32.mrb[0].mxu0
        %v522 = vadd.f32 %v261, %v521
        %v523 = vpop.f32.mrb[0].mxu0
        %v524 = vpop.f32.mrb[0].mxu0
        %v525 = vadd.f32 %v261, %v524
        %v526 = vpop.f32.mrb[0].mxu0
        %527 = vmatprep.mubr.bf16.mxu0 %v326
        %528 = vmatmul.mubr.bf16.gmra.mrb[0].mxu0 %v325
        %v529 = vpop.f32.mrb[0].mxu0
        %v530 = vadd.f32 %v261, %v529
        %v531 = vpop.f32.mrb[0].mxu0
        %v532 = vpop.f32.mrb[0].mxu0
        %v533 = vadd.f32 %v261, %v532
        %v534 = vpop.f32.mrb[0].mxu0
        %535 = vdwg.mxu0
        %536 = vst [vmem:[%s204] sm:$0xff] %v474
        %537 = vst [vmem:[%s204 + $0x8] sm:$0xff] %v477
        %538 = vst [vmem:[%s204 + $0x10] sm:$0xff] %v482
        %539 = vst [vmem:[%s204 + $0x18] sm:$0xff] %v485
        %540 = vst [vmem:[%s204 + $0x20] sm:$0xff] %v490
        %541 = vst [vmem:[%s204 + $0x28] sm:$0xff] %v493
        %542 = vst [vmem:[%s204 + $0x30] sm:$0xff] %v498
        %543 = vst [vmem:[%s204 + $0x38] sm:$0xff] %v501
        %544 = vst [vmem:[%s204 + $0x40] sm:$0xff] %v506
        %545 = vst [vmem:[%s204 + $0x48] sm:$0xff] %v509
        %546 = vst [vmem:[%s204 + $0x50] sm:$0xff] %v514
        %547 = vst [vmem:[%s204 + $0x58] sm:$0xff] %v517
        %548 = vst [vmem:[%s204 + $0x60] sm:$0xff] %v522
        %549 = vst [vmem:[%s204 + $0x68] sm:$0xff] %v525
        %550 = vst [vmem:[%s204 + $0x70] sm:$0xff] %v530
        %551 = vst [vmem:[%s204 + $0x78] sm:$0xff] %v533
        %s552 = sand.u32 %s97, 1
        %s553 = scalar_lea.sflag [#allocation4], %s552
        %s554 = sand.u32 %s97, 1
        %s555 = smul.addr %s554, 128
        %s556 = scalar_lea.vmem [#allocation7], %s555
        // Predicated region
        $region41: #{tpu_custom_call.1} parent=31 // pred_check
          %p557 = pneg %p107
        $region42: #{tpu_custom_call.1} parent=31 // pred_check_branch
          %559 = sbr.rel (%p557) target = $region44
        $region43: #{tpu_custom_call.1} parent=31 // pred_region
          %s560 = smul.u32 16, %s21
          %s562 = ssub.s32 2048, 2048
          %563 = vsyncadd %s553, %s562
          %s564 = smul.addr %s560, 128
          %s565 = scalar_lea.hbm %s3, %s564
          %s566 = sshll.u32 %s556, 4
          %s567 = int_to_ptr.vmem [resolvable:$true] %s566
          %572 = dma.vmem_to_hbm [thread:$0]  %s567, 2048, %s565, %s553, 128, 128, 8
        $region44: #{tpu_custom_call.1} parent=31 // pred_fallthru
          _
      $region32: #{tpu_custom_call.1} parent=5 // pred_fallthru
        _
      %p573 = scmp.le.s32.totalorder 2, %s16
      // Predicated region
      $region45: #{tpu_custom_call.1} parent=5 // pred_check
        %p574 = pneg %p573
      $region46: #{tpu_custom_call.1} parent=5 // pred_check_branch
        %576 = sbr.rel (%p574) target = $region48
      $region47: #{tpu_custom_call.1} parent=5 // pred_region
        %s577 = ssub.s32 %s16, 2
        // Predicated region
        $region49: #{tpu_custom_call.1} parent=47 // pred_check
          %p578 = pneg %p113
        $region50: #{tpu_custom_call.1} parent=47 // pred_check_branch
          %580 = sbr.rel (%p578) target = $region52
        $region51: #{tpu_custom_call.1} parent=47 // pred_region
          %s581 = sand.u32 %s98, 1
          %s582 = scalar_lea.sflag [#allocation4], %s581
          %s583 = sand.u32 %s98, 1
          %s584 = smul.addr %s583, 128
          %s585 = scalar_lea.vmem [#allocation7], %s584
          %586 = dma.done %s582, 2048
        $region52: #{tpu_custom_call.1} parent=47 // pred_fallthru
          _
      $region48: #{tpu_custom_call.1} parent=5 // pred_fallthru
        _
    $region6: #{tpu_custom_call.1} parent=1 // loop_footer
      %s20 = sadd.s32 1, %s16
    $region7: #{tpu_custom_call.1} parent=1 // loop_footer_branch
      %15 = sbr.rel target = $region3
    $region8: #{tpu_custom_call.1} parent=1 // loop_exit
      _
    %587 = vsyncpa [#allocation3], 1
    %s588 = scalar_lea.sflag [#allocation3], 1
    %589 = vsyncpa %s588, 1
    %590 = vsyncpa [#allocation6], 1
    %591 = vsyncpa [#allocation4], 1
    %s592 = scalar_lea.sflag [#allocation4], 1
    %593 = vsyncpa %s592, 1

// kernel: tpu_custom_call.1
$region0: #{tpu_custom_call.1}
  #allocation0 [shape = 'u32[]', space=smem, size = 0x4, offset = 0x4, fixed_abs, tag = 'smem constant byte address 0x4 - core index']
  #allocation1 [shape = 'u32[144,128]{1,0:T(1,128)}', space=vmem, size = 0x12000, scoped, tag = 'internal scratch']
  %s0 = inlined_call_operand.hbm [shape: bf16[256,256], index: 0, kind: input, shape index: {}]
  %s1 = inlined_call_operand.hbm [shape: bf16[256,128], index: 1, kind: input, shape index: {}]
  %s2 = inlined_call_operand.vmem [shape: f32[1,128], index: 2, kind: input, shape index: {}]
  %s3 = inlined_call_operand.hbm [shape: f32[256,128], index: 3, kind: output, shape index: {}]
  %s4 = sld [smem:[#allocation0]]
  $region53: #{tpu_custom_call.1} parent=0
    _
  %s6 = ssub.s32 1, %s4
  %s7 = scalar_select 0, %s6, %s4
  $region1: #{tpu_custom_call.1} parent=0
    #allocation2 [shape = 'u8[131072]{0}', space=vmem, size = 0x20000, scoped, tag = 'input window, operand 0']
    #allocation3 [shape = 's32[2]{0}', space=sflag, size = 0x8, scoped, tag = 'scoped memory for tpu_custom_call.1']
    #allocation4 [shape = 's32[2]{0}', space=sflag, size = 0x8, scoped, tag = 'scoped memory for tpu_custom_call.1']
    #allocation5 [shape = 'u8[65536]{0}', space=vmem, size = 0x10000, scoped, tag = 'input window, operand 1, single buffered']
    #allocation6 [shape = 's32[1]{0}', space=sflag, size = 0x4, scoped, tag = 'scoped memory for tpu_custom_call.1']
    #allocation7 [shape = 'u8[131072]{0}', space=vmem, size = 0x20000, scoped, tag = 'output window, operand 0']
    %8 = vsyncpa [#allocation3], 0
    %s9 = scalar_lea.sflag [#allocation3], 1
    %10 = vsyncpa %s9, 0
    %11 = vsyncpa [#allocation6], 0
    %12 = vsyncpa [#allocation4], 0
    %s13 = scalar_lea.sflag [#allocation4], 1
    %14 = vsyncpa %s13, 0
    loop: start=0, step=1, limit=4
    $region2: #{tpu_custom_call.1} parent=1 // loop_pre_header
      _
    $region3: #{tpu_custom_call.1} parent=1 // loop_header
      %s16 = sphi 0, %s20
      %p17 = scmp.ge.s32.totalorder %s16, 4
      %s26 = sphi 0, %s28
      %s29 = sphi 0, %s26
      %s30 = sphi 0, %s29
      %s46 = sphi 0, %s30
      %s50 = sphi 0, %s50
      %s52 = sphi 0, %s50
      %s53 = sphi 0, %s52
      %s67 = sphi 0, %s53
      %s71 = sphi 0, %s71
      %s73 = sphi 0, %s71
      %s74 = sphi 0, %s73
      %s88 = sphi 0, %s74
      %s94 = sphi 0, %s96
      %s97 = sphi 0, %s94
      %s98 = sphi 0, %s97
      %s114 = sphi 0, %s98
    $region4: #{tpu_custom_call.1} parent=1 // loop_header_branch
      %19 = sbr.rel (%p17) target = $region8
    $region5: #{tpu_custom_call.1} parent=1 // loop_body
      %s21 = ssub.s32 %s16, 1
      %s22 = ssub.s32 %s16, 2
      %s23 = sadd.s32 %s16, 1
      %s24 = ssub.s32 %s16, %s23
      %p25 = scmp.eq.s32.totalorder %s24, 0
      %s27 = sadd.s32 %s26, 1
      %s28 = scalar_select %p25, %s26, %s27
      %p31 = pneg %p25
      %p32 = scmp.eq.s32.totalorder %s16, 1
      %p33 = por %p31, %p32
      %p34 = scmp.ne.s32.totalorder %s26, %s29
      %p35 = scmp.eq.s32.totalorder %s16, 0
      %p36 = por %p34, %p35
      %p37 = scmp.ne.s32.totalorder %s26, %s29
      %p38 = scmp.eq.s32.totalorder %s21, 1
      %p39 = por %p37, %p38
      %p40 = scmp.ne.s32.totalorder %s29, %s30
      %p41 = scmp.eq.s32.totalorder %s21, 0
      %p42 = por %p40, %p41
      %p43 = scmp.ne.s32.totalorder %s29, %s30
      %p44 = scmp.eq.s32.totalorder %s22, 1
      %p45 = por %p43, %p44
      %p47 = scmp.ne.s32.totalorder %s30, %s46
      %p48 = scmp.eq.s32.totalorder %s22, 0
      %p49 = por %p47, %p48
      %s51 = sadd.s32 %s50, 1
      %p54 = scmp.eq.s32.totalorder %s16, 1
      %p55 = scmp.ne.s32.totalorder %s50, %s52
      %p56 = scmp.eq.s32.totalorder %s16, 0
      %p57 = por %p55, %p56
      %p58 = scmp.ne.s32.totalorder %s50, %s52
      %p59 = scmp.eq.s32.totalorder %s21, 1
      %p60 = por %p58, %p59
      %p61 = scmp.ne.s32.totalorder %s52, %s53
      %p62 = scmp.eq.s32.totalorder %s21, 0
      %p63 = por %p61, %p62
      %p64 = scmp.ne.s32.totalorder %s52, %s53
      %p65 = scmp.eq.s32.totalorder %s22, 1
      %p66 = por %p64, %p65
      %p68 = scmp.ne.s32.totalorder %s53, %s67
      %p69 = scmp.eq.s32.totalorder %s22, 0
      %p70 = por %p68, %p69
      %s72 = sadd.s32 %s71, 1
      %p75 = scmp.eq.s32.totalorder %s16, 1
      %p76 = scmp.ne.s32.totalorder %s71, %s73
      %p77 = scmp.eq.s32.totalorder %s16, 0
      %p78 = por %p76, %p77
      %p79 = scmp.ne.s32.totalorder %s71, %s73
      %p80 = scmp.eq.s32.totalorder %s21, 1
      %p81 = por %p79, %p80
      %p82 = scmp.ne.s32.totalorder %s73, %s74
      %p83 = scmp.eq.s32.totalorder %s21, 0
      %p84 = por %p82, %p83
      %p85 = scmp.ne.s32.totalorder %s73, %s74
      %p86 = scmp.eq.s32.totalorder %s22, 1
      %p87 = por %p85, %p86
      %p89 = scmp.ne.s32.totalorder %s74, %s88
      %p90 = scmp.eq.s32.totalorder %s22, 0
      %p91 = por %p89, %p90
      %s92 = ssub.s32 %s16, %s23
      %p93 = scmp.eq.s32.totalorder %s92, 0
      %s95 = sadd.s32 %s94, 1
      %s96 = scalar_select %p93, %s94, %s95
      %p99 = pneg %p93
      %p100 = scmp.eq.s32.totalorder %s16, 1
      %p101 = por %p99, %p100
      %p102 = scmp.ne.s32.totalorder %s94, %s97
      %p103 = scmp.eq.s32.totalorder %s16, 0
      %p104 = por %p102, %p103
      %p105 = scmp.ne.s32.totalorder %s94, %s97
      %p106 = scmp.eq.s32.totalorder %s21, 1
      %p107 = por %p105, %p106
      %p108 = scmp.ne.s32.totalorder %s97, %s98
      %p109 = scmp.eq.s32.totalorder %s21, 0
      %p110 = por %p108, %p109
      %p111 = scmp.ne.s32.totalorder %s97, %s98
      %p112 = scmp.eq.s32.totalorder %s22, 1
      %p113 = por %p111, %p112
      %p115 = scmp.ne.s32.totalorder %s98, %s114
      %p116 = scmp.eq.s32.totalorder %s22, 0
      %p117 = por %p115, %p116
      %p118 = scmp.le.s32.totalorder 1, %s16
      %p119 = scmp.lt.s32.totalorder %s16, 3
      %p120 = pnand %p118, %p119
      %p121 = pneg %p120
      // Predicated region
      $region9: #{tpu_custom_call.1} parent=5 // pred_check
        _
      $region10: #{tpu_custom_call.1} parent=5 // pred_check_branch
        %123 = sbr.rel (%p120) target = $region12
      $region11: #{tpu_custom_call.1} parent=5 // pred_region
        %s124 = ssub.s32 %s16, 1
        // Predicated region
        $region13: #{tpu_custom_call.1} parent=11 // pred_check
          %p125 = pneg %p63
        $region14: #{tpu_custom_call.1} parent=11 // pred_check_branch
          %127 = sbr.rel (%p125) target = $region16
        $region15: #{tpu_custom_call.1} parent=11 // pred_region
          %s129 = ssub.s32 2048, 2048
          %130 = vsyncadd [#allocation6], %s129
          %s131 = sshll.u32 [#allocation5], 4
          %s132 = int_to_ptr.vmem [resolvable:$true] %s131
          %137 = dma.hbm_to_vmem [thread:$0]  %s1, 2048, %s132, [#allocation6], 64, 64, 4
        $region16: #{tpu_custom_call.1} parent=11 // pred_fallthru
          _
        // Predicated region
        $region17: #{tpu_custom_call.1} parent=11 // pred_check
          %p138 = pneg %p84
        $region18: #{tpu_custom_call.1} parent=11 // pred_check_branch
          %140 = sbr.rel (%p138) target = $region20
        $region19: #{tpu_custom_call.1} parent=11 // pred_region
          _
        $region20: #{tpu_custom_call.1} parent=11 // pred_fallthru
          _
      $region12: #{tpu_custom_call.1} parent=5 // pred_fallthru
        _
      %p141 = scmp.lt.s32.totalorder %s16, 2
      // Predicated region
      $region21: #{tpu_custom_call.1} parent=5 // pred_check
        %p142 = pneg %p141
      $region22: #{tpu_custom_call.1} parent=5 // pred_check_branch
        %144 = sbr.rel (%p142) target = $region24
      $region23: #{tpu_custom_call.1} parent=5 // pred_region
        // Predicated region
        $region25: #{tpu_custom_call.1} parent=23 // pred_check
          %p145 = pneg %p36
        $region26: #{tpu_custom_call.1} parent=23 // pred_check_branch
          %147 = sbr.rel (%p145) target = $region28
        $region27: #{tpu_custom_call.1} parent=23 // pred_region
          %s148 = sand.u32 %s26, 1
          %s149 = scalar_lea.sflag [#allocation3], %s148
          %s150 = sand.u32 %s26, 1
          %s151 = smul.addr %s150, 128
          %s152 = scalar_lea.vmem [#allocation2], %s151
          %s153 = smul.u32 16, %s16
          %s155 = ssub.s32 2048, 2048
          %156 = vsyncadd %s149, %s155
          %s157 = smul.addr %s153, 2
          %s158 = smul.addr %s157, 64
          %s159 = scalar_lea.hbm %s0, %s158
          %s160 = sshll.u32 %s152, 4
          %s161 = int_to_ptr.vmem [resolvable:$true] %s160
          %166 = dma.hbm_to_vmem [thread:$0]  %s159, 2048, %s161, %s149, 128, 128, 8
        $region28: #{tpu_custom_call.1} parent=23 // pred_fallthru
          _
      $region24: #{tpu_custom_call.1} parent=5 // pred_fallthru
        _
      %p167 = scmp.le.s32.totalorder 1, %s16
      %p168 = scmp.lt.s32.totalorder %s16, 3
      %p169 = pnand %p167, %p168
      %p170 = pneg %p169
      // Predicated region
      $region29: #{tpu_custom_call.1} parent=5 // pred_check
        _
      $region30: #{tpu_custom_call.1} parent=5 // pred_check_branch
        %172 = sbr.rel (%p169) target = $region32
      $region31: #{tpu_custom_call.1} parent=5 // pred_region
        %s173 = ssub.s32 %s16, 1
        %s174 = sand.u32 %s29, 1
        %s175 = scalar_lea.sflag [#allocation3], %s174
        %s176 = sand.u32 %s29, 1
        %s177 = smul.addr %s176, 128
        %s178 = scalar_lea.vmem [#allocation2], %s177
        // Predicated region
        $region33: #{tpu_custom_call.1} parent=31 // pred_check
          %p179 = pneg %p42
        $region34: #{tpu_custom_call.1} parent=31 // pred_check_branch
          %181 = sbr.rel (%p179) target = $region36
        $region35: #{tpu_custom_call.1} parent=31 // pred_region
          %182 = dma.done %s175, 2048
        $region36: #{tpu_custom_call.1} parent=31 // pred_fallthru
          _
        // Predicated region
        $region37: #{tpu_custom_call.1} parent=31 // pred_check
          %p183 = pneg %p63
        $region38: #{tpu_custom_call.1} parent=31 // pred_check_branch
          %185 = sbr.rel (%p183) target = $region40
        $region39: #{tpu_custom_call.1} parent=31 // pred_region
          %186 = dma.done [#allocation6], 2048
        $region40: #{tpu_custom_call.1} parent=31 // pred_fallthru
          _
        %s187 = sand.u32 %s29, 1
        %s188 = scalar_lea.sflag [#allocation3], %s187
        %s189 = sand.u32 %s29, 1
        %s190 = smul.addr %s189, 128
        %s191 = scalar_lea.vmem [#allocation2], %s190
        %p192 = pneg %p42
        %p193 = pneg %p39
        %p194 = pneg %p63
        %p195 = pneg %p60
        %p196 = pneg %p84
        %p197 = pneg %p81
        %p198 = pneg %p110
        %p199 = pneg %p107
        %s200 = sand.u32 %s97, 1
        %s201 = scalar_lea.sflag [#allocation4], %s200
        %s202 = sand.u32 %s97, 1
        %s203 = smul.addr %s202, 128
        %s204 = scalar_lea.vmem [#allocation7], %s203
        %s205 = smul.u32 16, %s21
        %s206 = smul.u32 16, %s21
        %v208 = vld [vmem:[%s178] sm:$0xff]
        %v209 = vld [vmem:[%s178 + $0x8] sm:$0xff]
        %v210 = vld [vmem:[%s178 + $0x10] sm:$0xff]
        %v211 = vld [vmem:[%s178 + $0x18] sm:$0xff]
        %v212 = vld [vmem:[%s178 + $0x20] sm:$0xff]
        %v213 = vld [vmem:[%s178 + $0x28] sm:$0xff]
        %v214 = vld [vmem:[%s178 + $0x30] sm:$0xff]
        %v215 = vld [vmem:[%s178 + $0x38] sm:$0xff]
        %v216 = vld [vmem:[%s178 + $0x40] sm:$0xff]
        %v217 = vld [vmem:[%s178 + $0x48] sm:$0xff]
        %v218 = vld [vmem:[%s178 + $0x50] sm:$0xff]
        %v219 = vld [vmem:[%s178 + $0x58] sm:$0xff]
        %v220 = vld [vmem:[%s178 + $0x60] sm:$0xff]
        %v221 = vld [vmem:[%s178 + $0x68] sm:$0xff]
        %v222 = vld [vmem:[%s178 + $0x70] sm:$0xff]
        %v223 = vld [vmem:[%s178 + $0x78] sm:$0xff]
        %v224 = vld [vmem:[#allocation5] sm:$0xf]
        %v225 = vld [vmem:[#allocation5 + $0x4] sm:$0xf]
        %v226 = vld [vmem:[#allocation5 + $0x8] sm:$0xf]
        %v227 = vld [vmem:[#allocation5 + $0xc] sm:$0xf]
        %v228 = vld [vmem:[#allocation5 + $0x10] sm:$0xf]
        %v229 = vld [vmem:[#allocation5 + $0x14] sm:$0xf]
        %v230 = vld [vmem:[#allocation5 + $0x18] sm:$0xf]
        %v231 = vld [vmem:[#allocation5 + $0x1c] sm:$0xf]
        %v232 = vld [vmem:[#allocation5 + $0x20] sm:$0xf]
        %v233 = vld [vmem:[#allocation5 + $0x24] sm:$0xf]
        %v234 = vld [vmem:[#allocation5 + $0x28] sm:$0xf]
        %v235 = vld [vmem:[#allocation5 + $0x2c] sm:$0xf]
        %v236 = vld [vmem:[#allocation5 + $0x30] sm:$0xf]
        %v237 = vld [vmem:[#allocation5 + $0x34] sm:$0xf]
        %v238 = vld [vmem:[#allocation5 + $0x38] sm:$0xf]
        %v239 = vld [vmem:[#allocation5 + $0x3c] sm:$0xf]
        %v240 = vld [vmem:[#allocation5 + $0x40] sm:$0xf]
        %v241 = vld [vmem:[#allocation5 + $0x44] sm:$0xf]
        %v242 = vld [vmem:[#allocation5 + $0x48] sm:$0xf]
        %v243 = vld [vmem:[#allocation5 + $0x4c] sm:$0xf]
        %v244 = vld [vmem:[#allocation5 + $0x50] sm:$0xf]
        %v245 = vld [vmem:[#allocation5 + $0x54] sm:$0xf]
        %v246 = vld [vmem:[#allocation5 + $0x58] sm:$0xf]
        %v247 = vld [vmem:[#allocation5 + $0x5c] sm:$0xf]
        %v248 = vld [vmem:[#allocation5 + $0x60] sm:$0xf]
        %v249 = vld [vmem:[#allocation5 + $0x64] sm:$0xf]
        %v250 = vld [vmem:[#allocation5 + $0x68] sm:$0xf]
        %v251 = vld [vmem:[#allocation5 + $0x6c] sm:$0xf]
        %v252 = vld [vmem:[#allocation5 + $0x70] sm:$0xf]
        %v253 = vld [vmem:[#allocation5 + $0x74] sm:$0xf]
        %v254 = vld [vmem:[#allocation5 + $0x78] sm:$0xf]
        %v255 = vld [vmem:[#allocation5 + $0x7c] sm:$0xf]
        %v256 = vld [vmem:[%s2] sm:$0x1]
        %v258 = vlaneseq
        %v259 = vshrl.u32 %v258, 7
        %v260 = vsub.s32 0, %v259
        %v261 = vrot.slane %v256, %v260
        %v279 = vunpack.c.l.b16 %v208
        %v280 = vunpack.c.h.b16 %v208
        %v281 = vunpack.c.l.b16 %v209
        %v282 = vunpack.c.h.b16 %v209
        %v283 = vunpack.c.l.b16 %v210
        %v284 = vunpack.c.h.b16 %v210
        %v285 = vunpack.c.l.b16 %v211
        %v286 = vunpack.c.h.b16 %v211
        %v287 = vunpack.c.l.b16 %v212
        %v288 = vunpack.c.h.b16 %v212
        %v289 = vunpack.c.l.b16 %v213
        %v290 = vunpack.c.h.b16 %v213
        %v291 = vunpack.c.l.b16 %v214
        %v292 = vunpack.c.h.b16 %v214
        %v293 = vunpack.c.l.b16 %v215
        %v294 = vunpack.c.h.b16 %v215
        %v295 = vunpack.c.l.b16 %v216
        %v296 = vunpack.c.h.b16 %v216
        %v297 = vunpack.c.l.b16 %v217
        %v298 = vunpack.c.h.b16 %v217
        %v299 = vunpack.c.l.b16 %v218
        %v300 = vunpack.c.h.b16 %v218
        %v301 = vunpack.c.l.b16 %v219
        %v302 = vunpack.c.h.b16 %v219
        %v303 = vunpack.c.l.b16 %v220
        %v304 = vunpack.c.h.b16 %v220
        %v305 = vunpack.c.l.b16 %v221
        %v306 = vunpack.c.h.b16 %v221
        %v307 = vunpack.c.l.b16 %v222
        %v308 = vunpack.c.h.b16 %v222
        %v309 = vunpack.c.l.b16 %v223
        %v310 = vunpack.c.h.b16 %v223
        %v311 = vpack.c.b16 %v281, %v279
        %v312 = vpack.c.b16 %v282, %v280
        %v313 = vpack.c.b16 %v285, %v283
        %v314 = vpack.c.b16 %v286, %v284
        %v315 = vpack.c.b16 %v289, %v287
        %v316 = vpack.c.b16 %v290, %v288
        %v317 = vpack.c.b16 %v293, %v291
        %v318 = vpack.c.b16 %v294, %v292
        %v319 = vpack.c.b16 %v297, %v295
        %v320 = vpack.c.b16 %v298, %v296
        %v321 = vpack.c.b16 %v301, %v299
        %v322 = vpack.c.b16 %v302, %v300
        %v323 = vpack.c.b16 %v305, %v303
        %v324 = vpack.c.b16 %v306, %v304
        %v325 = vpack.c.b16 %v309, %v307
        %v326 = vpack.c.b16 %v310, %v308
        %v375 = vunpack.c.l.b16 %v224
        %v376 = vunpack.c.l.b16 %v225
        %v377 = vunpack.c.l.b16 %v226
        %v378 = vunpack.c.l.b16 %v227
        %v379 = vunpack.c.l.b16 %v228
        %v380 = vunpack.c.l.b16 %v229
        %v381 = vunpack.c.l.b16 %v230
        %v382 = vunpack.c.l.b16 %v231
        %v383 = vunpack.c.l.b16 %v232
        %v384 = vunpack.c.l.b16 %v233
        %v385 = vunpack.c.l.b16 %v234
        %v386 = vunpack.c.l.b16 %v235
        %v387 = vunpack.c.l.b16 %v236
        %v388 = vunpack.c.l.b16 %v237
        %v389 = vunpack.c.l.b16 %v238
        %v390 = vunpack.c.l.b16 %v239
        %v391 = vunpack.c.l.b16 %v240
        %v392 = vunpack.c.l.b16 %v241
        %v393 = vunpack.c.l.b16 %v242
        %v394 = vunpack.c.l.b16 %v243
        %v395 = vunpack.c.l.b16 %v244
        %v396 = vunpack.c.l.b16 %v245
        %v397 = vunpack.c.l.b16 %v246
        %v398 = vunpack.c.l.b16 %v247
        %v399 = vunpack.c.l.b16 %v248
        %v400 = vunpack.c.l.b16 %v249
        %v401 = vunpack.c.l.b16 %v250
        %v402 = vunpack.c.l.b16 %v251
        %v403 = vunpack.c.l.b16 %v252
        %v404 = vunpack.c.l.b16 %v253
        %v405 = vunpack.c.l.b16 %v254
        %v406 = vunpack.c.l.b16 %v255
        %v407 = vpack.c.b16 %v376, %v375
        %v408 = vpack.c.b16 %v378, %v377
        %v409 = vpack.c.b16 %v380, %v379
        %v410 = vpack.c.b16 %v382, %v381
        %v411 = vpack.c.b16 %v384, %v383
        %v412 = vpack.c.b16 %v386, %v385
        %v413 = vpack.c.b16 %v388, %v387
        %v414 = vpack.c.b16 %v390, %v389
        %v415 = vpack.c.b16 %v392, %v391
        %v416 = vpack.c.b16 %v394, %v393
        %v417 = vpack.c.b16 %v396, %v395
        %v418 = vpack.c.b16 %v398, %v397
        %v419 = vpack.c.b16 %v400, %v399
        %v420 = vpack.c.b16 %v402, %v401
        %v421 = vpack.c.b16 %v404, %v403
        %v422 = vpack.c.b16 %v406, %v405
        %439 = vmatprep.subr.bf16.mxu0 0
        %440 = vmatpush1.bf16.msra.mxu0 %v407
        %441 = vmatprep.subr.bf16.mxu0 0
        %442 = vmatpush1.bf16.msra.mxu0 %v408
        %443 = vmatprep.subr.bf16.mxu0 0
        %444 = vmatpush1.bf16.msra.mxu0 %v409
        %445 = vmatprep.subr.bf16.mxu0 0
        %446 = vmatpush1.bf16.msra.mxu0 %v410
        %447 = vmatprep.subr.bf16.mxu0 0
        %448 = vmatpush1.bf16.msra.mxu0 %v411
        %449 = vmatprep.subr.bf16.mxu0 0
        %450 = vmatpush1.bf16.msra.mxu0 %v412
        %451 = vmatprep.subr.bf16.mxu0 0
        %452 = vmatpush1.bf16.msra.mxu0 %v413
        %453 = vmatprep.subr.bf16.mxu0 0
        %454 = vmatpush1.bf16.msra.mxu0 %v414
        %455 = vmatprep.subr.bf16.mxu0 0
        %456 = vmatpush1.bf16.msra.mxu0 %v415
        %457 = vmatprep.subr.bf16.mxu0 0
        %458 = vmatpush1.bf16.msra.mxu0 %v416
        %459 = vmatprep.subr.bf16.mxu0 0
        %460 = vmatpush1.bf16.msra.mxu0 %v417
        %461 = vmatprep.subr.bf16.mxu0 0
        %462 = vmatpush1.bf16.msra.mxu0 %v418
        %463 = vmatprep.subr.bf16.mxu0 0
        %464 = vmatpush1.bf16.msra.mxu0 %v419
        %465 = vmatprep.subr.bf16.mxu0 0
        %466 = vmatpush1.bf16.msra.mxu0 %v420
        %467 = vmatprep.subr.bf16.mxu0 0
        %468 = vmatpush1.bf16.msra.mxu0 %v421
        %469 = vmatprep.subr.bf16.mxu0 0
        %470 = vmatpush1.bf16.msra.mxu0 %v422
        %471 = vmatprep.mubr.bf16.mxu0 %v312
        %472 = vmatmul.mubr.bf16.gmra.mrb[0].mxu0 %v311
        %v473 = vpop.f32.mrb[0].mxu0
        %v474 = vadd.f32 %v261, %v473
        %v475 = vpop.f32.mrb[0].mxu0
        %v476 = vpop.f32.mrb[0].mxu0
        %v477 = vadd.f32 %v261, %v476
        %v478 = vpop.f32.mrb[0].mxu0
        %479 = vmatprep.mubr.bf16.mxu0 %v314
        %480 = vmatmul.mubr.bf16.gmra.mrb[0].mxu0 %v313
        %v481 = vpop.f32.mrb[0].mxu0
        %v482 = vadd.f32 %v261, %v481
        %v483 = vpop.f32.mrb[0].mxu0
        %v484 = vpop.f32.mrb[0].mxu0
        %v485 = vadd.f32 %v261, %v484
        %v486 = vpop.f32.mrb[0].mxu0
        %487 = vmatprep.mubr.bf16.mxu0 %v316
        %488 = vmatmul.mubr.bf16.gmra.mrb[0].mxu0 %v315
        %v489 = vpop.f32.mrb[0].mxu0
        %v490 = vadd.f32 %v261, %v489
        %v491 = vpop.f32.mrb[0].mxu0
        %v492 = vpop.f32.mrb[0].mxu0
        %v493 = vadd.f32 %v261, %v492
        %v494 = vpop.f32.mrb[0].mxu0
        %495 = vmatprep.mubr.bf16.mxu0 %v318
        %496 = vmatmul.mubr.bf16.gmra.mrb[0].mxu0 %v317
        %v497 = vpop.f32.mrb[0].mxu0
        %v498 = vadd.f32 %v261, %v497
        %v499 = vpop.f32.mrb[0].mxu0
        %v500 = vpop.f32.mrb[0].mxu0
        %v501 = vadd.f32 %v261, %v500
        %v502 = vpop.f32.mrb[0].mxu0
        %503 = vmatprep.mubr.bf16.mxu0 %v320
        %504 = vmatmul.mubr.bf16.gmra.mrb[0].mxu0 %v319
        %v505 = vpop.f32.mrb[0].mxu0
        %v506 = vadd.f32 %v261, %v505
        %v507 = vpop.f32.mrb[0].mxu0
        %v508 = vpop.f32.mrb[0].mxu0
        %v509 = vadd.f32 %v261, %v508
        %v510 = vpop.f32.mrb[0].mxu0
        %511 = vmatprep.mubr.bf16.mxu0 %v322
        %512 = vmatmul.mubr.bf16.gmra.mrb[0].mxu0 %v321
        %v513 = vpop.f32.mrb[0].mxu0
        %v514 = vadd.f32 %v261, %v513
        %v515 = vpop.f32.mrb[0].mxu0
        %v516 = vpop.f32.mrb[0].mxu0
        %v517 = vadd.f32 %v261, %v516
        %v518 = vpop.f32.mrb[0].mxu0
        %519 = vmatprep.mubr.bf16.mxu0 %v324
        %520 = vmatmul.mubr.bf16.gmra.mrb[0].mxu0 %v323
        %v521 = vpop.f32.mrb[0].mxu0
        %v522 = vadd.f32 %v261, %v521
        %v523 = vpop.f32.mrb[0].mxu0
        %v524 = vpop.f32.mrb[0].mxu0
        %v525 = vadd.f32 %v261, %v524
        %v526 = vpop.f32.mrb[0].mxu0
        %527 = vmatprep.mubr.bf16.mxu0 %v326
        %528 = vmatmul.mubr.bf16.gmra.mrb[0].mxu0 %v325
        %v529 = vpop.f32.mrb[0].mxu0
        %v530 = vadd.f32 %v261, %v529
        %v531 = vpop.f32.mrb[0].mxu0
        %v532 = vpop.f32.mrb[0].mxu0
        %v533 = vadd.f32 %v261, %v532
        %v534 = vpop.f32.mrb[0].mxu0
        %535 = vdwg.mxu0
        %536 = vst [vmem:[%s204] sm:$0xff] %v474
        %537 = vst [vmem:[%s204 + $0x8] sm:$0xff] %v477
        %538 = vst [vmem:[%s204 + $0x10] sm:$0xff] %v482
        %539 = vst [vmem:[%s204 + $0x18] sm:$0xff] %v485
        %540 = vst [vmem:[%s204 + $0x20] sm:$0xff] %v490
        %541 = vst [vmem:[%s204 + $0x28] sm:$0xff] %v493
        %542 = vst [vmem:[%s204 + $0x30] sm:$0xff] %v498
        %543 = vst [vmem:[%s204 + $0x38] sm:$0xff] %v501
        %544 = vst [vmem:[%s204 + $0x40] sm:$0xff] %v506
        %545 = vst [vmem:[%s204 + $0x48] sm:$0xff] %v509
        %546 = vst [vmem:[%s204 + $0x50] sm:$0xff] %v514
        %547 = vst [vmem:[%s204 + $0x58] sm:$0xff] %v517
        %548 = vst [vmem:[%s204 + $0x60] sm:$0xff] %v522
        %549 = vst [vmem:[%s204 + $0x68] sm:$0xff] %v525
        %550 = vst [vmem:[%s204 + $0x70] sm:$0xff] %v530
        %551 = vst [vmem:[%s204 + $0x78] sm:$0xff] %v533
        %s552 = sand.u32 %s97, 1
        %s553 = scalar_lea.sflag [#allocation4], %s552
        %s554 = sand.u32 %s97, 1
        %s555 = smul.addr %s554, 128
        %s556 = scalar_lea.vmem [#allocation7], %s555
        // Predicated region
        $region41: #{tpu_custom_call.1} parent=31 // pred_check
          %p557 = pneg %p107
        $region42: #{tpu_custom_call.1} parent=31 // pred_check_branch
          %559 = sbr.rel (%p557) target = $region44
        $region43: #{tpu_custom_call.1} parent=31 // pred_region
          %s560 = smul.u32 16, %s21
          %s562 = ssub.s32 2048, 2048
          %563 = vsyncadd %s553, %s562
          %s564 = smul.addr %s560, 128
          %s565 = scalar_lea.hbm %s3, %s564
          %s566 = sshll.u32 %s556, 4
          %s567 = int_to_ptr.vmem [resolvable:$true] %s566
          %572 = dma.vmem_to_hbm [thread:$0]  %s567, 2048, %s565, %s553, 128, 128, 8
        $region44: #{tpu_custom_call.1} parent=31 // pred_fallthru
          _
      $region32: #{tpu_custom_call.1} parent=5 // pred_fallthru
        _
      %p573 = scmp.le.s32.totalorder 2, %s16
      // Predicated region
      $region45: #{tpu_custom_call.1} parent=5 // pred_check
        %p574 = pneg %p573
      $region46: #{tpu_custom_call.1} parent=5 // pred_check_branch
        %576 = sbr.rel (%p574) target = $region48
      $region47: #{tpu_custom_call.1} parent=5 // pred_region
        %s577 = ssub.s32 %s16, 2
        // Predicated region
        $region49: #{tpu_custom_call.1} parent=47 // pred_check
          %p578 = pneg %p113
        $region50: #{tpu_custom_call.1} parent=47 // pred_check_branch
          %580 = sbr.rel (%p578) target = $region52
        $region51: #{tpu_custom_call.1} parent=47 // pred_region
          %s581 = sand.u32 %s98, 1
          %s582 = scalar_lea.sflag [#allocation4], %s581
          %s583 = sand.u32 %s98, 1
          %s584 = smul.addr %s583, 128
          %s585 = scalar_lea.vmem [#allocation7], %s584
          %586 = dma.done %s582, 2048
        $region52: #{tpu_custom_call.1} parent=47 // pred_fallthru
          _
      $region48: #{tpu_custom_call.1} parent=5 // pred_fallthru
        _
    $region6: #{tpu_custom_call.1} parent=1 // loop_footer
      %s20 = sadd.s32 1, %s16
    $region7: #{tpu_custom_call.1} parent=1 // loop_footer_branch
      %15 = sbr.rel target = $region3
    $region8: #{tpu_custom_call.1} parent=1 // loop_exit
      _
    %587 = vsyncpa [#allocation3], 1
    %s588 = scalar_lea.sflag [#allocation3], 1
    %589 = vsyncpa %s588, 1
    %590 = vsyncpa [#allocation6], 1
    %591 = vsyncpa [#allocation4], 1
    %s592 = scalar_lea.sflag [#allocation4], 1
    %593 = vsyncpa %s592, 1

</llo_original>
